<compile_context>
chip_gen: v7x
topology: tpu7x:2x2x1
jax: 0.10.0
libtpu: 0.0.40
codegen_flags: <defaults>
</compile_context>

<pallas_src>
import functools

import jax
import jax.numpy as jnp
import numpy as np
from jax.experimental import pallas as pl
from jax.experimental.pallas import tpu as pltpu

LRELU_NEG_SLOPE = 0.2  # constant.LReLu_negative_slope in ASFFNet


def _spectral_normalize(w, n_power_iterations=5, eps=1e-12):
    """W / sigma(W); sigma estimated by power iteration on (Cout, Cin*k*k)."""
    cout = w.shape[0]
    w_mat = w.reshape(cout, -1).astype(jnp.float32)
    u = jax.random.normal(jax.random.PRNGKey(17), (cout,), dtype=jnp.float32)
    u = u / (jnp.linalg.norm(u) + eps)
    v = None
    for _ in range(n_power_iterations):
        v = w_mat.T @ u
        v = v / (jnp.linalg.norm(v) + eps)
        u = w_mat @ v
        u = u / (jnp.linalg.norm(u) + eps)
    sigma = u @ (w_mat @ v)
    return (w / sigma).astype(w.dtype)


def _conv_lrelu_kernel(w_ref, b_ref, x_ref, o_ref, *, neg_slope):
    # w_ref: (Cout_pad, K)     spectral-normalized, im2col-flattened weights
    # b_ref: (Cout_pad, 1)     bias column
    # x_ref: (K, tm)           im2col patch slab for this grid step (lane-dense)
    # o_ref: (Cout_pad, tm)    output slab (lane-dense, tm % 128 == 0)
    acc = jnp.dot(w_ref[...], x_ref[...], preferred_element_type=jnp.float32)
    acc = acc + b_ref[...]                               # lane-broadcast bias
    o_ref[...] = jnp.where(acc >= 0.0, acc, acc * neg_slope).astype(o_ref.dtype)


def conv_bn_lrelu_forward(x, w, b, *, stride, neg_slope=LRELU_NEG_SLOPE):
    """Equivalent of Conv_BN_LReLU(input_ch, output_ch, kernel, stride, bias)(x)."""
    N, Cin, H, W_in = x.shape
    Cout, Cin_w, k, k2 = w.shape
    assert Cin_w == Cin and k == k2
    pad = (k - 1) // 2
    s = int(stride)
    Ho = (H + 2 * pad - k) // s + 1
    Wo = (W_in + 2 * pad - k) // s + 1

    w_sn = _spectral_normalize(w)

    # ---- layout plumbing in the wrapper (im2col); hot matmul stays in Pallas
    xp = jnp.pad(x, ((0, 0), (0, 0), (pad, pad), (pad, pad)))
    cols = []
    for kh in range(k):
        for kw in range(k):
            cols.append(xp[:, :, kh:kh + s * (Ho - 1) + 1:s,
                              kw:kw + s * (Wo - 1) + 1:s])     # (N, Cin, Ho, Wo)
    patches = jnp.stack(cols, axis=2)                          # (N, Cin, k*k, Ho, Wo)
    K = Cin * k * k
    M = N * Ho * Wo
    x_col = patches.transpose(1, 2, 0, 3, 4).reshape(K, M)     # (K, N*Ho*Wo)

    # pad lane dim to a multiple of 128 (lane-dense output slab),
    # Cout to a multiple of 8 (sublane)
    M_pad = ((M + 127) // 128) * 128
    Cout_pad = ((Cout + 7) // 8) * 8
    x_col = jnp.pad(x_col.astype(jnp.float32), ((0, 0), (0, M_pad - M)))
    w_mat = jnp.pad(w_sn.reshape(Cout, K).astype(jnp.float32),
                    ((0, Cout_pad - Cout), (0, 0)))
    b_col = jnp.pad(b.astype(jnp.float32), (0, Cout_pad - Cout)).reshape(Cout_pad, 1)

    # tile the lane dim; prefer >=2 grid steps so v7x's two TensorCores split work
    tm = M_pad
    for cand in (4096, 2048, 1024, 512, 256, 128):
        if M_pad % cand == 0 and M_pad // cand >= 2:
            tm = cand
            break
    grid = (M_pad // tm,)

    cost = pl.CostEstimate(
        flops=2 * Cout_pad * K * M_pad,
        transcendentals=0,
        bytes_accessed=4 * (Cout_pad * K + K * M_pad + Cout_pad + Cout_pad * M_pad),
    )

    out_slab = pl.pallas_call(
        functools.partial(_conv_lrelu_kernel, neg_slope=neg_slope),
        out_shape=jax.ShapeDtypeStruct((Cout_pad, M_pad), jnp.float32),
        grid=grid,
        in_specs=[
            pl.BlockSpec((Cout_pad, K), lambda i: (0, 0)),   # weights (broadcast)
            pl.BlockSpec((Cout_pad, 1), lambda i: (0, 0)),   # bias (broadcast)
            pl.BlockSpec((K, tm), lambda i: (0, i)),         # im2col slab tile
        ],
        out_specs=pl.BlockSpec((Cout_pad, tm), lambda i: (0, i)),
        compiler_params=pltpu.CompilerParams(dimension_semantics=("parallel",)),
        cost_estimate=cost,
    )(w_mat, b_col, x_col)

    out = out_slab[:Cout, :M].reshape(Cout, N, Ho, Wo).transpose(1, 0, 2, 3)
    return out.astype(x.dtype)


def _ref_forward(x, w, b, stride, padding, neg_slope):
    """Pure-numpy direct convolution + bias + LeakyReLU reference."""
    x = np.asarray(x, np.float64)
    w = np.asarray(w, np.float64)
    b = np.asarray(b, np.float64)
    N, Cin, H, W = x.shape
    Cout, _, k, _ = w.shape
    s = stride
    xp = np.pad(x, ((0, 0), (0, 0), (padding, padding), (padding, padding)))
    Ho = (H + 2 * padding - k) // s + 1
    Wo = (W + 2 * padding - k) // s + 1
    out = np.zeros((N, Cout, Ho, Wo), dtype=np.float64)
    for kh in range(k):
        for kw in range(k):
            patch = xp[:, :, kh:kh + s * (Ho - 1) + 1:s,
                          kw:kw + s * (Wo - 1) + 1:s]          # (N, Cin, Ho, Wo)
            out += np.einsum('ncij,oc->noij', patch, w[:, :, kh, kw])
    out += b[None, :, None, None]
    out = np.where(out >= 0.0, out, out * neg_slope)
    return out.astype(np.float32)


if __name__ == "__main__":
    key = jax.random.PRNGKey(0)
    k1, k2, k3 = jax.random.split(key, 3)
    N, Cin, H, W = 2, 4, 16, 16
    Cout, ksz = 8, 3

    x = jax.random.normal(k1, (N, Cin, H, W), dtype=jnp.float32)
    w = jax.random.normal(k2, (Cout, Cin, ksz, ksz), dtype=jnp.float32) * 0.1
    b = jax.random.normal(k3, (Cout,), dtype=jnp.float32) * 0.1

    w_sn = _spectral_normalize(w)
    pad = (ksz - 1) // 2

    # stride = 1
    y = conv_bn_lrelu_forward(x, w, b, stride=1)
    y = jax.block_until_ready(y)
    assert y.shape == (N, Cout, H, W)
    y_ref = _ref_forward(np.asarray(x), np.asarray(w_sn), np.asarray(b),
                         1, pad, LRELU_NEG_SLOPE)
    np.testing.assert_allclose(np.asarray(y), y_ref, rtol=1e-4, atol=1e-4)

    # stride = 2 (also a supported Conv_BN_LReLU configuration)
    y2 = conv_bn_lrelu_forward(x, w, b, stride=2)
    y2 = jax.block_until_ready(y2)
    assert y2.shape == (N, Cout, H // 2, W // 2)
    y2_ref = _ref_forward(np.asarray(x), np.asarray(w_sn), np.asarray(b),
                          2, pad, LRELU_NEG_SLOPE)
    np.testing.assert_allclose(np.asarray(y2), y2_ref, rtol=1e-4, atol=1e-4)

    print("KERNEL_OK")
</pallas_src>

<mosaic_0001>
module attributes {stable_mosaic.version = 11 : i64} {
  func.func @_conv_lrelu_kernel(%arg0: i32, %arg1: memref<8x36xf32, #tpu.memory_space<vmem>>, %arg2: memref<8x1xf32, #tpu.memory_space<vmem>>, %arg3: memref<36x256xf32, #tpu.memory_space<vmem>>, %arg4: memref<8x256xf32, #tpu.memory_space<vmem>>) attributes {dimension_semantics = [#tpu.dimension_semantics<parallel>], iteration_bounds = array<i64: 2>, scalar_prefetch = 0 : i64, scratch_operands = 0 : i64, tpu.core_type = #tpu.core_type<tc>, window_params = [{pipeline_mode = #tpu.pipeline_mode<synchronous>, transform_indices = @transform_0, window_bounds = array<i64: 8, 36>}, {pipeline_mode = #tpu.pipeline_mode<synchronous>, transform_indices = @transform_1, window_bounds = array<i64: 8, 1>}, {transform_indices = @transform_2, window_bounds = array<i64: 36, 256>}, {transform_indices = @transform_3, window_bounds = array<i64: 8, 256>}]} {
    %c0 = arith.constant 0 : index
    %c0_0 = arith.constant 0 : index
    %0 = vector.load %arg1[%c0, %c0_0] : memref<8x36xf32, #tpu.memory_space<vmem>>, vector<8x36xf32>
    %c0_1 = arith.constant 0 : index
    %c0_2 = arith.constant 0 : index
    %1 = vector.load %arg3[%c0_1, %c0_2] : memref<36x256xf32, #tpu.memory_space<vmem>>, vector<36x256xf32>
    %cst = arith.constant dense<0.000000e+00> : vector<8x256xf32>
    %2 = tpu.matmul %0, %1, %cst {dimension_numbers = #tpu.dot_dimension_numbers<[1], [0], [0], [1], [0, 0, 1, 1], [], []>} : vector<8x36xf32>, vector<36x256xf32>, vector<8x256xf32> -> vector<8x256xf32>
    %c0_3 = arith.constant 0 : index
    %c0_4 = arith.constant 0 : index
    %3 = vector.load %arg2[%c0_3, %c0_4] : memref<8x1xf32, #tpu.memory_space<vmem>>, vector<8x1xf32>
    %4 = vector.broadcast %3 : vector<8x1xf32> to vector<8x256xf32>
    %5 = arith.addf %2, %4 : vector<8x256xf32>
    %cst_5 = arith.constant 0.000000e+00 : f32
    %6 = vector.broadcast %cst_5 : f32 to vector<8x256xf32>
    %7 = arith.cmpf oge, %5, %6 : vector<8x256xf32>
    %cst_6 = arith.constant 2.000000e-01 : f32
    %8 = vector.broadcast %cst_6 : f32 to vector<8x256xf32>
    %9 = arith.mulf %5, %8 : vector<8x256xf32>
    %10 = arith.select %7, %5, %9 : vector<8x256xi1>, vector<8x256xf32>
    %c0_7 = arith.constant 0 : index
    %c0_8 = arith.constant 0 : index
    %11 = vector.load %arg4[%c0_7, %c0_8] : memref<8x256xf32, #tpu.memory_space<vmem>>, vector<8x256xf32>
    tpu.vector_store %arg4[%c0_7, %c0_8], %10 {strides = array<i32>} : memref<8x256xf32, #tpu.memory_space<vmem>>, vector<8x256xf32>,
    return
  }
  func.func @transform_0(%arg0: i32) -> (i32, i32) {
    %c0_i32 = arith.constant 0 : i32
    %c0_i32_0 = arith.constant 0 : i32
    %c0_i32_1 = arith.constant 0 : i32
    return %c0_i32, %c0_i32_0 : i32, i32
  }
  func.func @transform_1(%arg0: i32) -> (i32, i32) {
    %c0_i32 = arith.constant 0 : i32
    %c0_i32_0 = arith.constant 0 : i32
    %c0_i32_1 = arith.constant 0 : i32
    return %c0_i32, %c0_i32_0 : i32, i32
  }
  func.func @transform_2(%arg0: i32) -> (i32, i32) {
    %c0_i32 = arith.constant 0 : i32
    %c0_i32_0 = arith.constant 0 : i32
    return %c0_i32, %arg0 : i32, i32
  }
  func.func @transform_3(%arg0: i32) -> (i32, i32) {
    %c0_i32 = arith.constant 0 : i32
    %c0_i32_0 = arith.constant 0 : i32
    return %c0_i32, %arg0 : i32, i32
  }
}

</mosaic_0001>

<llo_original>
// kernel: tpu_custom_call.1
$region0: #{tpu_custom_call.1}
  #allocation0 [shape = 'u32[]', space=smem, size = 0x4, offset = 0x4, fixed_abs, tag = 'smem constant byte address 0x4 - core index']
  #allocation1 [shape = 'u32[144,128]{1,0:T(1,128)}', space=vmem, size = 0x12000, scoped, tag = 'internal scratch']
  %s0 = inlined_call_operand.vmem [shape: f32[8,36], index: 0, kind: input, shape index: {}]
  %s1 = inlined_call_operand.vmem [shape: f32[8,1], index: 1, kind: input, shape index: {}]
  %s2 = inlined_call_operand.hbm [shape: f32[36,512], index: 2, kind: input, shape index: {}]
  %s3 = inlined_call_operand.hbm [shape: f32[8,512], index: 3, kind: output, shape index: {}]
  %s4 = sld [smem:[#allocation0]]
  $region49: #{tpu_custom_call.1} parent=0
    _
  %s6 = ssub.s32 1, %s4
  %s7 = scalar_select 0, %s6, %s4
  $region1: #{tpu_custom_call.1} parent=0
    #allocation2 [shape = 'u8[81920]{0}', space=vmem, size = 0x14000, scoped, tag = 'input window, operand 2']
    #allocation3 [shape = 's32[2]{0}', space=sflag, size = 0x8, scoped, tag = 'scoped memory for tpu_custom_call.1']
    #allocation4 [shape = 's32[2]{0}', space=sflag, size = 0x8, scoped, tag = 'scoped memory for tpu_custom_call.1']
    #allocation5 [shape = 'u8[16384]{0}', space=vmem, size = 0x4000, scoped, tag = 'output window, operand 0']
    %8 = vsyncpa [#allocation3], 0
    %s9 = scalar_lea.sflag [#allocation3], 1
    %10 = vsyncpa %s9, 0
    %11 = vsyncpa [#allocation4], 0
    %s12 = scalar_lea.sflag [#allocation4], 1
    %13 = vsyncpa %s12, 0
    loop: start=0, step=1, limit=4
    $region2: #{tpu_custom_call.1} parent=1 // loop_pre_header
      _
    $region3: #{tpu_custom_call.1} parent=1 // loop_header
      %s15 = sphi 0, %s19
      %p16 = scmp.ge.s32.totalorder %s15, 4
      %s23 = sphi 0, %s23
      %s25 = sphi 0, %s23
      %s26 = sphi 0, %s25
      %s40 = sphi 0, %s26
      %s44 = sphi 0, %s44
      %s46 = sphi 0, %s44
      %s47 = sphi 0, %s46
      %s61 = sphi 0, %s47
      %s67 = sphi 0, %s69
      %s70 = sphi 0, %s67
      %s71 = sphi 0, %s70
      %s87 = sphi 0, %s71
      %s93 = sphi 0, %s95
      %s96 = sphi 0, %s93
      %s97 = sphi 0, %s96
      %s113 = sphi 0, %s97
    $region4: #{tpu_custom_call.1} parent=1 // loop_header_branch
      %18 = sbr.rel (%p16) target = $region8
    $region5: #{tpu_custom_call.1} parent=1 // loop_body
      %s20 = ssub.s32 %s15, 1
      %s21 = ssub.s32 %s15, 2
      %s22 = sadd.s32 %s15, 1
      %s24 = sadd.s32 %s23, 1
      %p27 = scmp.eq.s32.totalorder %s15, 1
      %p28 = scmp.ne.s32.totalorder %s23, %s25
      %p29 = scmp.eq.s32.totalorder %s15, 0
      %p30 = por %p28, %p29
      %p31 = scmp.ne.s32.totalorder %s23, %s25
      %p32 = scmp.eq.s32.totalorder %s20, 1
      %p33 = por %p31, %p32
      %p34 = scmp.ne.s32.totalorder %s25, %s26
      %p35 = scmp.eq.s32.totalorder %s20, 0
      %p36 = por %p34, %p35
      %p37 = scmp.ne.s32.totalorder %s25, %s26
      %p38 = scmp.eq.s32.totalorder %s21, 1
      %p39 = por %p37, %p38
      %p41 = scmp.ne.s32.totalorder %s26, %s40
      %p42 = scmp.eq.s32.totalorder %s21, 0
      %p43 = por %p41, %p42
      %s45 = sadd.s32 %s44, 1
      %p48 = scmp.eq.s32.totalorder %s15, 1
      %p49 = scmp.ne.s32.totalorder %s44, %s46
      %p50 = scmp.eq.s32.totalorder %s15, 0
      %p51 = por %p49, %p50
      %p52 = scmp.ne.s32.totalorder %s44, %s46
      %p53 = scmp.eq.s32.totalorder %s20, 1
      %p54 = por %p52, %p53
      %p55 = scmp.ne.s32.totalorder %s46, %s47
      %p56 = scmp.eq.s32.totalorder %s20, 0
      %p57 = por %p55, %p56
      %p58 = scmp.ne.s32.totalorder %s46, %s47
      %p59 = scmp.eq.s32.totalorder %s21, 1
      %p60 = por %p58, %p59
      %p62 = scmp.ne.s32.totalorder %s47, %s61
      %p63 = scmp.eq.s32.totalorder %s21, 0
      %p64 = por %p62, %p63
      %s65 = ssub.s32 %s15, %s22
      %p66 = scmp.eq.s32.totalorder %s65, 0
      %s68 = sadd.s32 %s67, 1
      %s69 = scalar_select %p66, %s67, %s68
      %p72 = pneg %p66
      %p73 = scmp.eq.s32.totalorder %s15, 1
      %p74 = por %p72, %p73
      %p75 = scmp.ne.s32.totalorder %s67, %s70
      %p76 = scmp.eq.s32.totalorder %s15, 0
      %p77 = por %p75, %p76
      %p78 = scmp.ne.s32.totalorder %s67, %s70
      %p79 = scmp.eq.s32.totalorder %s20, 1
      %p80 = por %p78, %p79
      %p81 = scmp.ne.s32.totalorder %s70, %s71
      %p82 = scmp.eq.s32.totalorder %s20, 0
      %p83 = por %p81, %p82
      %p84 = scmp.ne.s32.totalorder %s70, %s71
      %p85 = scmp.eq.s32.totalorder %s21, 1
      %p86 = por %p84, %p85
      %p88 = scmp.ne.s32.totalorder %s71, %s87
      %p89 = scmp.eq.s32.totalorder %s21, 0
      %p90 = por %p88, %p89
      %s91 = ssub.s32 %s15, %s22
      %p92 = scmp.eq.s32.totalorder %s91, 0
      %s94 = sadd.s32 %s93, 1
      %s95 = scalar_select %p92, %s93, %s94
      %p98 = pneg %p92
      %p99 = scmp.eq.s32.totalorder %s15, 1
      %p100 = por %p98, %p99
      %p101 = scmp.ne.s32.totalorder %s93, %s96
      %p102 = scmp.eq.s32.totalorder %s15, 0
      %p103 = por %p101, %p102
      %p104 = scmp.ne.s32.totalorder %s93, %s96
      %p105 = scmp.eq.s32.totalorder %s20, 1
      %p106 = por %p104, %p105
      %p107 = scmp.ne.s32.totalorder %s96, %s97
      %p108 = scmp.eq.s32.totalorder %s20, 0
      %p109 = por %p107, %p108
      %p110 = scmp.ne.s32.totalorder %s96, %s97
      %p111 = scmp.eq.s32.totalorder %s21, 1
      %p112 = por %p110, %p111
      %p114 = scmp.ne.s32.totalorder %s97, %s113
      %p115 = scmp.eq.s32.totalorder %s21, 0
      %p116 = por %p114, %p115
      %p117 = scmp.le.s32.totalorder 1, %s15
      %p118 = scmp.lt.s32.totalorder %s15, 3
      %p119 = pnand %p117, %p118
      %p120 = pneg %p119
      // Predicated region
      $region9: #{tpu_custom_call.1} parent=5 // pred_check
        _
      $region10: #{tpu_custom_call.1} parent=5 // pred_check_branch
        %122 = sbr.rel (%p119) target = $region12
      $region11: #{tpu_custom_call.1} parent=5 // pred_region
        %s123 = ssub.s32 %s15, 1
        // Predicated region
        $region13: #{tpu_custom_call.1} parent=11 // pred_check
          %p124 = pneg %p36
        $region14: #{tpu_custom_call.1} parent=11 // pred_check_branch
          %126 = sbr.rel (%p124) target = $region16
        $region15: #{tpu_custom_call.1} parent=11 // pred_region
          _
        $region16: #{tpu_custom_call.1} parent=11 // pred_fallthru
          _
        // Predicated region
        $region17: #{tpu_custom_call.1} parent=11 // pred_check
          %p127 = pneg %p57
        $region18: #{tpu_custom_call.1} parent=11 // pred_check_branch
          %129 = sbr.rel (%p127) target = $region20
        $region19: #{tpu_custom_call.1} parent=11 // pred_region
          _
        $region20: #{tpu_custom_call.1} parent=11 // pred_fallthru
          _
      $region12: #{tpu_custom_call.1} parent=5 // pred_fallthru
        _
      %p130 = scmp.lt.s32.totalorder %s15, 2
      // Predicated region
      $region21: #{tpu_custom_call.1} parent=5 // pred_check
        %p131 = pneg %p130
      $region22: #{tpu_custom_call.1} parent=5 // pred_check_branch
        %133 = sbr.rel (%p131) target = $region24
      $region23: #{tpu_custom_call.1} parent=5 // pred_region
        // Predicated region
        $region25: #{tpu_custom_call.1} parent=23 // pred_check
          %p134 = pneg %p77
        $region26: #{tpu_custom_call.1} parent=23 // pred_check_branch
          %136 = sbr.rel (%p134) target = $region28
        $region27: #{tpu_custom_call.1} parent=23 // pred_region
          %s137 = sand.u32 %s67, 1
          %s138 = scalar_lea.sflag [#allocation3], %s137
          %s139 = sand.u32 %s67, 1
          %s140 = smul.addr %s139, 80
          %s141 = scalar_lea.vmem [#allocation2], %s140
          %s142 = smul.u32 2, %s15
          %s144 = ssub.s32 1280, 1280
          %145 = vsyncadd %s138, %s144
          %s146 = smul.addr %s142, 128
          %s147 = scalar_lea.hbm %s2, %s146
          %s148 = sshll.u32 %s141, 4
          %s149 = int_to_ptr.vmem [resolvable:$true] %s148
          %154 = dma.hbm_to_vmem [thread:$0]  %s147, 1280, %s149, %s138, 512, 256, 16
        $region28: #{tpu_custom_call.1} parent=23 // pred_fallthru
          _
      $region24: #{tpu_custom_call.1} parent=5 // pred_fallthru
        _
      %p155 = scmp.le.s32.totalorder 1, %s15
      %p156 = scmp.lt.s32.totalorder %s15, 3
      %p157 = pnand %p155, %p156
      %p158 = pneg %p157
      // Predicated region
      $region29: #{tpu_custom_call.1} parent=5 // pred_check
        _
      $region30: #{tpu_custom_call.1} parent=5 // pred_check_branch
        %160 = sbr.rel (%p157) target = $region32
      $region31: #{tpu_custom_call.1} parent=5 // pred_region
        %s161 = ssub.s32 %s15, 1
        %s162 = sand.u32 %s70, 1
        %s163 = scalar_lea.sflag [#allocation3], %s162
        %s164 = sand.u32 %s70, 1
        %s165 = smul.addr %s164, 80
        %s166 = scalar_lea.vmem [#allocation2], %s165
        // Predicated region
        $region33: #{tpu_custom_call.1} parent=31 // pred_check
          %p167 = pneg %p83
        $region34: #{tpu_custom_call.1} parent=31 // pred_check_branch
          %169 = sbr.rel (%p167) target = $region36
        $region35: #{tpu_custom_call.1} parent=31 // pred_region
          %170 = dma.done %s163, 1280
        $region36: #{tpu_custom_call.1} parent=31 // pred_fallthru
          _
        %p171 = pneg %p36
        %p172 = pneg %p33
        %p173 = pneg %p57
        %p174 = pneg %p54
        %s175 = sand.u32 %s70, 1
        %s176 = scalar_lea.sflag [#allocation3], %s175
        %s177 = sand.u32 %s70, 1
        %s178 = smul.addr %s177, 80
        %s179 = scalar_lea.vmem [#allocation2], %s178
        %p180 = pneg %p83
        %p181 = pneg %p80
        %p182 = pneg %p109
        %p183 = pneg %p106
        %s184 = sand.u32 %s96, 1
        %s185 = scalar_lea.sflag [#allocation4], %s184
        %s186 = sand.u32 %s96, 1
        %s187 = smul.addr %s186, 16
        %s188 = scalar_lea.vmem [#allocation5], %s187
        %s189 = smul.u32 2, %s20
        %s190 = smul.u32 2, %s20
        %v191 = vld [vmem:[%s0] sm:$0xff]
        %v192 = vld [vmem:[%s166] sm:$0xff]
        %v193 = vld [vmem:[%s166 + $0x8] sm:$0xff]
        %v194 = vld [vmem:[%s166 + $0x10] sm:$0xff]
        %v195 = vld [vmem:[%s166 + $0x18] sm:$0xff]
        %v196 = vld [vmem:[%s166 + $0x20] sm:$0xff]
        %v197 = vld [vmem:[%s166 + $0x28] sm:$0xff]
        %v198 = vld [vmem:[%s166 + $0x30] sm:$0xff]
        %v199 = vld [vmem:[%s166 + $0x38] sm:$0xff]
        %v200 = vld [vmem:[%s166 + $0x40] sm:$0xf]
        %v201 = vld [vmem:[%s166 + $0x48] sm:$0xf]
        %v202 = vld [vmem:[%s1] sm:$0xff]
        %204 = vset.pattern.permute.xlu0 0
        %205 = vperm.xlu0 %204, %v202
        %v206 = vpop.permute.xlu0 %205
        %vm208 = vcmask 293888
        %v210 = vsel %vm208, %v191, 0
        %vm212 = vcmask 1043456
        %v214 = vsel %vm212, %v200, 0
        %v217 = vsel %vm212, %v201, 0
        %219 = vmatprep.subr.mxu0 %v193
        %220 = vmatpush1.msra.mxu0 %v192
        %221 = vmatprep.subr.mxu0 %v195
        %222 = vmatpush1.msra.mxu0 %v194
        %223 = vmatprep.subr.mxu0 %v197
        %224 = vmatpush1.msra.mxu0 %v196
        %225 = vmatprep.subr.mxu0 %v199
        %226 = vmatpush1.msra.mxu0 %v198
        %227 = vmatprep.subr.mxu0 %v217
        %228 = vmatpush1.msra.mxu0 %v214
        %229 = vmatprep.subr.mxu0 0.0
        %230 = vmatpush1.msra.mxu0 0.0
        %231 = vmatprep.subr.mxu0 0.0
        %232 = vmatpush1.msra.mxu0 0.0
        %233 = vmatprep.subr.mxu0 0.0
        %234 = vmatpush1.msra.mxu0 0.0
        %235 = vmatprep.subr.mxu0 0.0
        %236 = vmatpush1.msra.mxu0 0.0
        %237 = vmatprep.subr.mxu0 0.0
        %238 = vmatpush1.msra.mxu0 0.0
        %239 = vmatprep.subr.mxu0 0.0
        %240 = vmatpush1.msra.mxu0 0.0
        %241 = vmatprep.subr.mxu0 0.0
        %242 = vmatpush1.msra.mxu0 0.0
        %243 = vmatprep.subr.mxu0 0.0
        %244 = vmatpush1.msra.mxu0 0.0
        %245 = vmatprep.subr.mxu0 0.0
        %246 = vmatpush1.msra.mxu0 0.0
        %247 = vmatprep.subr.mxu0 0.0
        %248 = vmatpush1.msra.mxu0 0.0
        %249 = vmatprep.subr.mxu0 0.0
        %250 = vmatpush1.msra.mxu0 0.0
        %251 = vmatprep.subr.mxu0 0.0
        %252 = vmatpush1.msra.mxu0 0.0
        %253 = vmatprep.subr.mxu0 0.0
        %254 = vmatpush1.msra.mxu0 0.0
        %255 = vmatprep.subr.mxu0 0.0
        %256 = vmatpush1.msra.mxu0 0.0
        %257 = vmatprep.subr.mxu0 0.0
        %258 = vmatpush1.msra.mxu0 0.0
        %259 = vmatprep.subr.mxu0 0.0
        %260 = vmatpush1.msra.mxu0 0.0
        %261 = vmatprep.subr.mxu0 0.0
        %262 = vmatpush1.msra.mxu0 0.0
        %263 = vmatprep.subr.mxu0 0.0
        %264 = vmatpush1.msra.mxu0 0.0
        %265 = vmatprep.subr.mxu0 0.0
        %266 = vmatpush1.msra.mxu0 0.0
        %267 = vmatprep.subr.mxu0 0.0
        %268 = vmatpush1.msra.mxu0 0.0
        %269 = vmatprep.subr.mxu0 0.0
        %270 = vmatpush1.msra.mxu0 0.0
        %271 = vmatprep.subr.mxu0 0.0
        %272 = vmatpush1.msra.mxu0 0.0
        %273 = vmatprep.subr.mxu0 0.0
        %274 = vmatpush1.msra.mxu0 0.0
        %275 = vmatprep.subr.mxu0 0.0
        %276 = vmatpush1.msra.mxu0 0.0
        %277 = vmatprep.subr.mxu0 0.0
        %278 = vmatpush1.msra.mxu0 0.0
        %279 = vmatprep.subr.mxu0 0.0
        %280 = vmatpush1.msra.mxu0 0.0
        %281 = vmatprep.subr.mxu0 0.0
        %282 = vmatpush1.msra.mxu0 0.0
        %283 = vmatprep.mubr.f32.mxu0 0.0
        %284 = vmatmul.mubr.f32.gmra.mrb[0].mxu0 %v210
        %v285 = vpop.f32.mrb[0].mxu0
        %v286 = vadd.f32 %v206, %v285
        %v287 = vpop.f32.mrb[0].mxu0
        %v288 = vadd.f32 %v206, %v287
        %289 = vdwg.mxu0
        %vm290 = vcmp.ge.f32.partialorder %v286, 0.0
        %vm291 = vcmp.ge.f32.partialorder %v288, 0.0
        %v292 = vmul.f32 %v286, 0.2
        %v293 = vmul.f32 %v288, 0.2
        %v294 = vsel %vm290, %v286, %v292
        %v295 = vsel %vm291, %v288, %v293
        %296 = vst [vmem:[%s188] sm:$0xff] %v294
        %297 = vst [vmem:[%s188 + $0x8] sm:$0xff] %v295
        %s298 = sand.u32 %s96, 1
        %s299 = scalar_lea.sflag [#allocation4], %s298
        %s300 = sand.u32 %s96, 1
        %s301 = smul.addr %s300, 16
        %s302 = scalar_lea.vmem [#allocation5], %s301
        // Predicated region
        $region37: #{tpu_custom_call.1} parent=31 // pred_check
          %p303 = pneg %p106
        $region38: #{tpu_custom_call.1} parent=31 // pred_check_branch
          %305 = sbr.rel (%p303) target = $region40
        $region39: #{tpu_custom_call.1} parent=31 // pred_region
          %s306 = smul.u32 2, %s20
          %s308 = ssub.s32 256, 256
          %309 = vsyncadd %s299, %s308
          %s310 = smul.addr %s306, 128
          %s311 = scalar_lea.hbm %s3, %s310
          %s313 = sshll.u32 %s302, 4
          %s314 = int_to_ptr.vmem [resolvable:$true] %s313
          %316 = dma.vmem_to_hbm [thread:$0]  %s314, 256, %s311, %s299
        $region40: #{tpu_custom_call.1} parent=31 // pred_fallthru
          _
      $region32: #{tpu_custom_call.1} parent=5 // pred_fallthru
        _
      %p317 = scmp.le.s32.totalorder 2, %s15
      // Predicated region
      $region41: #{tpu_custom_call.1} parent=5 // pred_check
        %p318 = pneg %p317
      $region42: #{tpu_custom_call.1} parent=5 // pred_check_branch
        %320 = sbr.rel (%p318) target = $region44
      $region43: #{tpu_custom_call.1} parent=5 // pred_region
        %s321 = ssub.s32 %s15, 2
        // Predicated region
        $region45: #{tpu_custom_call.1} parent=43 // pred_check
          %p322 = pneg %p112
        $region46: #{tpu_custom_call.1} parent=43 // pred_check_branch
          %324 = sbr.rel (%p322) target = $region48
        $region47: #{tpu_custom_call.1} parent=43 // pred_region
          %s325 = sand.u32 %s97, 1
          %s326 = scalar_lea.sflag [#allocation4], %s325
          %s327 = sand.u32 %s97, 1
          %s328 = smul.addr %s327, 16
          %s329 = scalar_lea.vmem [#allocation5], %s328
          %330 = dma.done %s326, 256
        $region48: #{tpu_custom_call.1} parent=43 // pred_fallthru
          _
      $region44: #{tpu_custom_call.1} parent=5 // pred_fallthru
        _
    $region6: #{tpu_custom_call.1} parent=1 // loop_footer
      %s19 = sadd.s32 1, %s15
    $region7: #{tpu_custom_call.1} parent=1 // loop_footer_branch
      %14 = sbr.rel target = $region3
    $region8: #{tpu_custom_call.1} parent=1 // loop_exit
      _
    %331 = vsyncpa [#allocation3], 1
    %s332 = scalar_lea.sflag [#allocation3], 1
    %333 = vsyncpa %s332, 1
    %334 = vsyncpa [#allocation4], 1
    %s335 = scalar_lea.sflag [#allocation4], 1
    %336 = vsyncpa %s335, 1

</llo_original>
